<compile_context>
chip_gen: v6e
topology: v6e:2x2x1
jax: 0.10.0
libtpu: 0.0.40
codegen_flags: <defaults>
</compile_context>

<pallas_src>
import math
import functools

import jax
import jax.numpy as jnp
from jax.experimental import pallas as pl
from jax.experimental.pallas import tpu as pltpu


def _round_up(x, m):
    return (x + m - 1) // m * m


def _hw_defaults():
    """Return (vmem_limit_bytes, decoder token tile, decoder vocab tile).

    v7x has 64 MiB physical VMEM per TC -> keep the scoped limit at 48 MB and
    tv=4096.  v5e/v6e have 128 MiB -> raise the limit to ~100 MB and widen the
    vocab tile to 8192 (halves h re-reads again, ~120 grid steps total).
    """
    try:
        vmem_phys = int(pltpu.get_tpu_info().vmem_capacity_bytes)
    except Exception:
        vmem_phys = 64 * 1024 * 1024            # conservative (v7x-sized)
    if vmem_phys >= 96 * 1024 * 1024:           # v5e / v6e (128 MiB physical)
        return 100 * 1024 * 1024, 512, 8192
    return 48 * 1024 * 1024, 512, 4096          # v7x (64 MiB physical)


# ---------------------------------------------------------------------------
# Kernel 1: dense (H->H) + exact GELU + LayerNorm, fused per token tile.
# ---------------------------------------------------------------------------
def _transform_kernel(x_ref, w_ref, b_ref, g_ref, beta_ref, o_ref, *, eps, hidden):
    # x_ref: [tm, H] f32 (cast to bf16 in-kernel), w_ref: [H, H] bf16 (in,out),
    # b_ref/g_ref/beta_ref: [1, H] f32, o_ref: [tm, H] bf16
    h = jnp.dot(x_ref[...].astype(jnp.bfloat16), w_ref[...],
                preferred_element_type=jnp.float32)
    h = h + b_ref[...]
    # exact (erf) GELU, as in original BERT ACT2FN["gelu"]  (f32 math)
    h = 0.5 * h * (1.0 + jax.lax.erf(h * (1.0 / math.sqrt(2.0))))
    # LayerNorm over hidden dim, two-pass stats (avoids E[x^2]-E[x]^2 cancel)
    inv_h = 1.0 / hidden
    mean = jnp.sum(h, axis=-1, keepdims=True) * inv_h
    c = h - mean
    var = jnp.sum(c * c, axis=-1, keepdims=True) * inv_h    # biased variance
    h = c * jax.lax.rsqrt(var + eps)
    h = h * g_ref[...] + beta_ref[...]
    o_ref[...] = h.astype(o_ref.dtype)


# ---------------------------------------------------------------------------
# Kernel 2: decoder matmul (H -> V) + bias, tiled over (vocab, token).
# ---------------------------------------------------------------------------
def _decoder_kernel(h_ref, wd_ref, bd_ref, o_ref):
    # h_ref: [tm, H] bf16, wd_ref: [H, tv] bf16, bd_ref: [1, tv] f32,
    # o_ref: [tm, tv] logits_dtype
    acc = jnp.dot(h_ref[...], wd_ref[...], preferred_element_type=jnp.float32)
    o_ref[...] = (acc + bd_ref[...]).astype(o_ref.dtype)


def prepare_params(params):
    """One-time parameter prep (hoisted out of the per-forward path).

    Casts matmul weights to bf16 and reshapes 1-D bias/affine vectors to
    (1, X) rows so the per-call wrapper does no weight-sized XLA work.
    """
    return {
        "dense_w": params["dense_w"].astype(jnp.bfloat16),       # [H, H]
        "dense_b": params["dense_b"].reshape(1, -1).astype(jnp.float32),
        "ln_gamma": params["ln_gamma"].reshape(1, -1).astype(jnp.float32),
        "ln_beta": params["ln_beta"].reshape(1, -1).astype(jnp.float32),
        "dec_w": params["dec_w"].astype(jnp.bfloat16),            # [H, V]
        "dec_b": params["dec_b"].reshape(1, -1).astype(jnp.float32),
    }


def bert_lm_prediction_head(x, prepared, *, eps=1e-12, tm=None, tv=None,
                            tm_transform=None, logits_dtype=jnp.float32):
    """x: [B, S, H] float32, prepared = prepare_params(...)  ->  [B, S, V]."""
    B, S, H = x.shape
    M = B * S
    V = prepared["dec_w"].shape[1]

    vmem_limit, tm_d, tv_d = _hw_defaults()

    # ---- tile sizes (clamped to the problem; ragged tails handled by Pallas
    #      boundary masking, so no padding / slicing of the logits needed) ----
    if tm is None:
        tm = tm_d
    if tv is None:
        tv = tv_d
    if tm_transform is None:
        tm_transform = 1024
    tm = min(tm, _round_up(M, 8))               # sublane multiple
    tm_transform = min(tm_transform, _round_up(M, 8))
    tv = min(tv, _round_up(V, 128))             # lane multiple

    x2d = x.reshape(M, H)                       # f32; cast to bf16 in-kernel

    # --- transform (dense + gelu + layernorm), grid over token tiles ---
    h2d = pl.pallas_call(
        functools.partial(_transform_kernel, eps=eps, hidden=float(H)),
        out_shape=jax.ShapeDtypeStruct((M, H), jnp.bfloat16),
        grid_spec=pltpu.PrefetchScalarGridSpec(
            num_scalar_prefetch=0,
            grid=(pl.cdiv(M, tm_transform),),
            in_specs=[
                pl.BlockSpec((tm_transform, H), lambda i: (i, 0)),
                pl.BlockSpec((H, H), lambda i: (0, 0)),
                pl.BlockSpec((1, H), lambda i: (0, 0)),
                pl.BlockSpec((1, H), lambda i: (0, 0)),
                pl.BlockSpec((1, H), lambda i: (0, 0)),
            ],
            out_specs=pl.BlockSpec((tm_transform, H), lambda i: (i, 0)),
        ),
        compiler_params=pltpu.CompilerParams(
            dimension_semantics=("parallel",),
            vmem_limit_bytes=vmem_limit),
    )(x2d, prepared["dense_w"], prepared["dense_b"],
      prepared["ln_gamma"], prepared["ln_beta"])

    # --- decoder (vocab projection) ---
    # Grid is (vocab outer, token inner): Wd's block index depends only on the
    # outer axis, so each [H, tv] vocab slab is read from HBM once and reused
    # across all token tiles.  Vocab is the leading parallel axis so a v7x
    # megacore shards Wd (each core streams half of it exactly once).
    y2d = pl.pallas_call(
        _decoder_kernel,
        out_shape=jax.ShapeDtypeStruct((M, V), logits_dtype),
        grid_spec=pltpu.PrefetchScalarGridSpec(
            num_scalar_prefetch=0,
            grid=(pl.cdiv(V, tv), pl.cdiv(M, tm)),
            in_specs=[
                pl.BlockSpec((tm, H), lambda j, i: (i, 0)),
                pl.BlockSpec((H, tv), lambda j, i: (0, j)),
                pl.BlockSpec((1, tv), lambda j, i: (0, j)),
            ],
            out_specs=pl.BlockSpec((tm, tv), lambda j, i: (i, j)),
        ),
        compiler_params=pltpu.CompilerParams(
            dimension_semantics=("parallel", "parallel"),
            vmem_limit_bytes=vmem_limit),
    )(h2d, prepared["dec_w"], prepared["dec_b"])

    return y2d.reshape(B, S, V)


def _reference(x, params, eps=1e-12):
    h = x @ params["dense_w"] + params["dense_b"]
    h = 0.5 * h * (1.0 + jax.lax.erf(h / jnp.sqrt(2.0)))
    mean = jnp.mean(h, axis=-1, keepdims=True)
    var = jnp.mean((h - mean) ** 2, axis=-1, keepdims=True)
    h = (h - mean) / jnp.sqrt(var + eps)
    h = h * params["ln_gamma"] + params["ln_beta"]
    return h @ params["dec_w"] + params["dec_b"]


if __name__ == "__main__":
    # Small BERT-like config: hidden=128, vocab=256, batch=2, seq=8.
    B, S, H, V = 2, 8, 128, 256
    eps = 1e-12

    key = jax.random.PRNGKey(0)
    kx, kw1, kb1, kwd = jax.random.split(key, 4)

    x = jax.random.normal(kx, (B, S, H), dtype=jnp.float32)

    params = {
        # weights stored as [in, out] (i.e. torch Linear weight transposed)
        "dense_w": 0.02 * jax.random.normal(kw1, (H, H), dtype=jnp.float32),
        "dense_b": 0.02 * jax.random.normal(kb1, (H,), dtype=jnp.float32),
        "ln_gamma": jnp.ones((H,), dtype=jnp.float32),
        "ln_beta": jnp.zeros((H,), dtype=jnp.float32),
        "dec_w": 0.02 * jax.random.normal(kwd, (H, V), dtype=jnp.float32),
        "dec_b": jnp.zeros((V,), dtype=jnp.float32),  # module inits bias to zeros
    }

    # One-time parameter prep (bf16 cast / bias reshape) — hoisted out of the
    # per-forward path per perf review.
    prepared = prepare_params(params)

    y = bert_lm_prediction_head(x, prepared, eps=eps)
    y = jax.block_until_ready(y)

    y_ref = _reference(x, params, eps=eps)
    assert y.shape == (B, S, V)
    # bf16 matmul operands (f32 accumulation) -> slightly looser tolerance
    assert jnp.allclose(y, y_ref, atol=2e-2, rtol=2e-2), "mismatch vs reference"

    print("KERNEL_OK")
</pallas_src>

<mosaic_0001>
module attributes {stable_mosaic.version = 11 : i64} {
  func.func @_transform_kernel(%arg0: i32, %arg1: memref<16x128xf32, #tpu.memory_space<vmem>>, %arg2: memref<128x128xbf16, #tpu.memory_space<vmem>>, %arg3: memref<1x128xf32, #tpu.memory_space<vmem>>, %arg4: memref<1x128xf32, #tpu.memory_space<vmem>>, %arg5: memref<1x128xf32, #tpu.memory_space<vmem>>, %arg6: memref<16x128xbf16, #tpu.memory_space<vmem>>) attributes {dimension_semantics = [#tpu.dimension_semantics<parallel>], iteration_bounds = array<i64: 1>, scalar_prefetch = 0 : i64, scratch_operands = 0 : i64, tpu.core_type = #tpu.core_type<tc>, window_params = [{transform_indices = @transform_0, window_bounds = array<i64: 16, 128>}, {pipeline_mode = #tpu.pipeline_mode<synchronous>, transform_indices = @transform_1, window_bounds = array<i64: 128, 128>}, {pipeline_mode = #tpu.pipeline_mode<synchronous>, transform_indices = @transform_2, window_bounds = array<i64: 1, 128>}, {pipeline_mode = #tpu.pipeline_mode<synchronous>, transform_indices = @transform_3, window_bounds = array<i64: 1, 128>}, {pipeline_mode = #tpu.pipeline_mode<synchronous>, transform_indices = @transform_4, window_bounds = array<i64: 1, 128>}, {transform_indices = @transform_5, window_bounds = array<i64: 16, 128>}]} {
    %c0 = arith.constant 0 : index
    %c0_0 = arith.constant 0 : index
    %0 = vector.load %arg1[%c0, %c0_0] : memref<16x128xf32, #tpu.memory_space<vmem>>, vector<16x128xf32>
    %1 = arith.truncf %0 : vector<16x128xf32> to vector<16x128xbf16>
    %c0_1 = arith.constant 0 : index
    %c0_2 = arith.constant 0 : index
    %2 = vector.load %arg2[%c0_1, %c0_2] : memref<128x128xbf16, #tpu.memory_space<vmem>>, vector<128x128xbf16>
    %cst = arith.constant dense<0.000000e+00> : vector<16x128xf32>
    %3 = tpu.matmul %1, %2, %cst {dimension_numbers = #tpu.dot_dimension_numbers<[1], [0], [0], [1], [0, 0, 1, 1], [], []>} : vector<16x128xbf16>, vector<128x128xbf16>, vector<16x128xf32> -> vector<16x128xf32>
    %c0_3 = arith.constant 0 : index
    %c0_4 = arith.constant 0 : index
    %4 = vector.load %arg3[%c0_3, %c0_4] : memref<1x128xf32, #tpu.memory_space<vmem>>, vector<1x128xf32>
    %5 = vector.broadcast %4 : vector<1x128xf32> to vector<16x128xf32>
    %6 = arith.addf %3, %5 : vector<16x128xf32>
    %cst_5 = arith.constant 5.000000e-01 : f32
    %7 = vector.broadcast %cst_5 : f32 to vector<16x128xf32>
    %8 = arith.mulf %7, %6 : vector<16x128xf32>
    %cst_6 = arith.constant 0.707106769 : f32
    %9 = vector.broadcast %cst_6 : f32 to vector<16x128xf32>
    %10 = arith.mulf %6, %9 : vector<16x128xf32>
    %11 = math.erf %10 : vector<16x128xf32>
    %cst_7 = arith.constant 1.000000e+00 : f32
    %12 = vector.broadcast %cst_7 : f32 to vector<16x128xf32>
    %13 = arith.addf %12, %11 : vector<16x128xf32>
    %14 = arith.mulf %8, %13 : vector<16x128xf32>
    %cst_8 = arith.constant dense<0.000000e+00> : vector<16xf32>
    %15 = vector.multi_reduction <add>, %14, %cst_8 [1] : vector<16x128xf32> to vector<16xf32>
    %16 = vector.shape_cast %15 : vector<16xf32> to vector<16x1xf32>
    %cst_9 = arith.constant 7.812500e-03 : f32
    %17 = vector.broadcast %cst_9 : f32 to vector<16x1xf32>
    %18 = arith.mulf %16, %17 : vector<16x1xf32>
    %19 = vector.broadcast %18 : vector<16x1xf32> to vector<16x128xf32>
    %20 = arith.subf %14, %19 : vector<16x128xf32>
    %21 = arith.mulf %20, %20 : vector<16x128xf32>
    %cst_10 = arith.constant dense<0.000000e+00> : vector<16xf32>
    %22 = vector.multi_reduction <add>, %21, %cst_10 [1] : vector<16x128xf32> to vector<16xf32>
    %23 = vector.shape_cast %22 : vector<16xf32> to vector<16x1xf32>
    %cst_11 = arith.constant 7.812500e-03 : f32
    %24 = vector.broadcast %cst_11 : f32 to vector<16x1xf32>
    %25 = arith.mulf %23, %24 : vector<16x1xf32>
    %cst_12 = arith.constant 9.99999996E-13 : f32
    %26 = vector.broadcast %cst_12 : f32 to vector<16x1xf32>
    %27 = arith.addf %25, %26 : vector<16x1xf32>
    %28 = math.rsqrt %27 : vector<16x1xf32>
    %29 = vector.broadcast %28 : vector<16x1xf32> to vector<16x128xf32>
    %30 = arith.mulf %20, %29 : vector<16x128xf32>
    %c0_13 = arith.constant 0 : index
    %c0_14 = arith.constant 0 : index
    %31 = vector.load %arg4[%c0_13, %c0_14] : memref<1x128xf32, #tpu.memory_space<vmem>>, vector<1x128xf32>
    %32 = vector.broadcast %31 : vector<1x128xf32> to vector<16x128xf32>
    %33 = arith.mulf %30, %32 : vector<16x128xf32>
    %c0_15 = arith.constant 0 : index
    %c0_16 = arith.constant 0 : index
    %34 = vector.load %arg5[%c0_15, %c0_16] : memref<1x128xf32, #tpu.memory_space<vmem>>, vector<1x128xf32>
    %35 = vector.broadcast %34 : vector<1x128xf32> to vector<16x128xf32>
    %36 = arith.addf %33, %35 : vector<16x128xf32>
    %37 = arith.truncf %36 : vector<16x128xf32> to vector<16x128xbf16>
    %c0_17 = arith.constant 0 : index
    %c0_18 = arith.constant 0 : index
    %38 = vector.load %arg6[%c0_17, %c0_18] : memref<16x128xbf16, #tpu.memory_space<vmem>>, vector<16x128xbf16>
    tpu.vector_store %arg6[%c0_17, %c0_18], %37 {strides = array<i32>} : memref<16x128xbf16, #tpu.memory_space<vmem>>, vector<16x128xbf16>,
    return
  }
  func.func @transform_0(%arg0: i32) -> (i32, i32) {
    %c0_i32 = arith.constant 0 : i32
    %c0_i32_0 = arith.constant 0 : i32
    return %arg0, %c0_i32 : i32, i32
  }
  func.func @transform_1(%arg0: i32) -> (i32, i32) {
    %c0_i32 = arith.constant 0 : i32
    %c0_i32_0 = arith.constant 0 : i32
    %c0_i32_1 = arith.constant 0 : i32
    return %c0_i32, %c0_i32_0 : i32, i32
  }
  func.func @transform_2(%arg0: i32) -> (i32, i32) {
    %c0_i32 = arith.constant 0 : i32
    %c0_i32_0 = arith.constant 0 : i32
    %c0_i32_1 = arith.constant 0 : i32
    return %c0_i32, %c0_i32_0 : i32, i32
  }
  func.func @transform_3(%arg0: i32) -> (i32, i32) {
    %c0_i32 = arith.constant 0 : i32
    %c0_i32_0 = arith.constant 0 : i32
    %c0_i32_1 = arith.constant 0 : i32
    return %c0_i32, %c0_i32_0 : i32, i32
  }
  func.func @transform_4(%arg0: i32) -> (i32, i32) {
    %c0_i32 = arith.constant 0 : i32
    %c0_i32_0 = arith.constant 0 : i32
    %c0_i32_1 = arith.constant 0 : i32
    return %c0_i32, %c0_i32_0 : i32, i32
  }
  func.func @transform_5(%arg0: i32) -> (i32, i32) {
    %c0_i32 = arith.constant 0 : i32
    %c0_i32_0 = arith.constant 0 : i32
    return %arg0, %c0_i32 : i32, i32
  }
}

</mosaic_0001>

<llo_original>
// kernel: tpu_custom_call.1
$region0: #{tpu_custom_call.1}
  #allocation0 [shape = 'u32[]', space=smem, size = 0x4, offset = 0x4, fixed_abs, tag = 'smem constant byte address 0x4 - core index']
  #allocation1 [shape = 'u32[144,128]{1,0:T(1,128)}', space=vmem, size = 0x12000, scoped, tag = 'internal scratch']
  %s0 = inlined_call_operand.hbm [shape: f32[16,128], index: 0, kind: input, shape index: {}]
  %s1 = inlined_call_operand.hbm [shape: bf16[128,128], index: 1, kind: input, shape index: {}]
  %s2 = inlined_call_operand.vmem [shape: f32[1,128], index: 2, kind: input, shape index: {}]
  %s3 = inlined_call_operand.vmem [shape: f32[1,128], index: 3, kind: input, shape index: {}]
  %s4 = inlined_call_operand.vmem [shape: f32[1,128], index: 4, kind: input, shape index: {}]
  %s5 = inlined_call_operand.hbm [shape: bf16[16,128], index: 5, kind: output, shape index: {}]
  %s6 = sld [smem:[#allocation0]]
  $region38: #{tpu_custom_call.1} parent=0
    _
  %s8 = ssub.s32 1, %s6
  %s9 = scalar_select 0, %s8, %s6
  $region1: #{tpu_custom_call.1} parent=0
    #allocation2 [shape = 'u8[8192]{0}', space=vmem, size = 0x2000, scoped, tag = 'input window, operand 0, single buffered']
    #allocation3 [shape = 's32[1]{0}', space=sflag, size = 0x4, scoped, tag = 'scoped memory for tpu_custom_call.1']
    #allocation4 [shape = 's32[1]{0}', space=sflag, size = 0x4, scoped, tag = 'scoped memory for tpu_custom_call.1']
    #allocation5 [shape = 'u8[32768]{0}', space=vmem, size = 0x8000, scoped, tag = 'input window, operand 1, single buffered']
    #allocation6 [shape = 's32[1]{0}', space=sflag, size = 0x4, scoped, tag = 'scoped memory for tpu_custom_call.1']
    #allocation7 [shape = 'u8[4096]{0}', space=vmem, size = 0x1000, scoped, tag = 'output window, operand 0, single buffered']
    %10 = vsyncpa [#allocation3], 0
    %11 = vsyncpa [#allocation6], 0
    %12 = vsyncpa [#allocation4], 0
    // Predicated region
    $region2: #{tpu_custom_call.1} parent=1 // pred_check
      _
    $region3: #{tpu_custom_call.1} parent=1 // pred_check_branch
      %14 = sbr.rel (0) target = $region5
    $region4: #{tpu_custom_call.1} parent=1 // pred_region
      %s16 = ssub.s32 256, 256
      %17 = vsyncadd [#allocation3], %s16
      %s18 = sshll.u32 [#allocation2], 4
      %s19 = int_to_ptr.vmem [resolvable:$true] %s18
      %24 = dma.hbm_to_vmem [thread:$0]  %s0, 256, %s19, [#allocation3], 128, 128, 8
    $region5: #{tpu_custom_call.1} parent=1 // pred_fallthru
      _
    // Predicated region
    $region6: #{tpu_custom_call.1} parent=1 // pred_check
      _
    $region7: #{tpu_custom_call.1} parent=1 // pred_check_branch
      %26 = sbr.rel (0) target = $region9
    $region8: #{tpu_custom_call.1} parent=1 // pred_region
      %s28 = ssub.s32 1024, 1024
      %29 = vsyncadd [#allocation6], %s28
      %s30 = sshll.u32 [#allocation5], 4
      %s31 = int_to_ptr.vmem [resolvable:$true] %s30
      %36 = dma.hbm_to_vmem [thread:$0]  %s1, 1024, %s31, [#allocation6], 64, 64, 4
    $region9: #{tpu_custom_call.1} parent=1 // pred_fallthru
      _
    // Predicated region
    $region10: #{tpu_custom_call.1} parent=1 // pred_check
      _
    $region11: #{tpu_custom_call.1} parent=1 // pred_check_branch
      %38 = sbr.rel (0) target = $region13
    $region12: #{tpu_custom_call.1} parent=1 // pred_region
      _
    $region13: #{tpu_custom_call.1} parent=1 // pred_fallthru
      _
    // Predicated region
    $region14: #{tpu_custom_call.1} parent=1 // pred_check
      _
    $region15: #{tpu_custom_call.1} parent=1 // pred_check_branch
      %40 = sbr.rel (0) target = $region17
    $region16: #{tpu_custom_call.1} parent=1 // pred_region
      _
    $region17: #{tpu_custom_call.1} parent=1 // pred_fallthru
      _
    // Predicated region
    $region18: #{tpu_custom_call.1} parent=1 // pred_check
      _
    $region19: #{tpu_custom_call.1} parent=1 // pred_check_branch
      %42 = sbr.rel (0) target = $region21
    $region20: #{tpu_custom_call.1} parent=1 // pred_region
      _
    $region21: #{tpu_custom_call.1} parent=1 // pred_fallthru
      _
    // Predicated region
    $region22: #{tpu_custom_call.1} parent=1 // pred_check
      _
    $region23: #{tpu_custom_call.1} parent=1 // pred_check_branch
      %44 = sbr.rel (0) target = $region25
    $region24: #{tpu_custom_call.1} parent=1 // pred_region
      %45 = dma.done [#allocation3], 256
    $region25: #{tpu_custom_call.1} parent=1 // pred_fallthru
      _
    // Predicated region
    $region26: #{tpu_custom_call.1} parent=1 // pred_check
      _
    $region27: #{tpu_custom_call.1} parent=1 // pred_check_branch
      %47 = sbr.rel (0) target = $region29
    $region28: #{tpu_custom_call.1} parent=1 // pred_region
      %48 = dma.done [#allocation6], 1024
    $region29: #{tpu_custom_call.1} parent=1 // pred_fallthru
      _
    %v50 = vld [vmem:[#allocation2] sm:$0xff]
    %v51 = vld [vmem:[#allocation2 + $0x8] sm:$0xff]
    %v52 = vpack.c.bf16 %v51, %v50
    %v53 = vld [vmem:[#allocation5] sm:$0xf]
    %v54 = vld [vmem:[#allocation5 + $0x4] sm:$0xf]
    %v55 = vld [vmem:[#allocation5 + $0x8] sm:$0xf]
    %v56 = vld [vmem:[#allocation5 + $0xc] sm:$0xf]
    %v57 = vld [vmem:[#allocation5 + $0x10] sm:$0xf]
    %v58 = vld [vmem:[#allocation5 + $0x14] sm:$0xf]
    %v59 = vld [vmem:[#allocation5 + $0x18] sm:$0xf]
    %v60 = vld [vmem:[#allocation5 + $0x1c] sm:$0xf]
    %v61 = vld [vmem:[#allocation5 + $0x20] sm:$0xf]
    %v62 = vld [vmem:[#allocation5 + $0x24] sm:$0xf]
    %v63 = vld [vmem:[#allocation5 + $0x28] sm:$0xf]
    %v64 = vld [vmem:[#allocation5 + $0x2c] sm:$0xf]
    %v65 = vld [vmem:[#allocation5 + $0x30] sm:$0xf]
    %v66 = vld [vmem:[#allocation5 + $0x34] sm:$0xf]
    %v67 = vld [vmem:[#allocation5 + $0x38] sm:$0xf]
    %v68 = vld [vmem:[#allocation5 + $0x3c] sm:$0xf]
    %v69 = vld [vmem:[%s2] sm:$0x1]
    %v71 = vlaneseq
    %v72 = vshrl.u32 %v71, 7
    %v73 = vsub.s32 0, %v72
    %v74 = vrot.slane %v69, %v73
    %v92 = vunpack.c.l.b16 %v53
    %v93 = vunpack.c.l.b16 %v54
    %v94 = vunpack.c.l.b16 %v55
    %v95 = vunpack.c.l.b16 %v56
    %v96 = vunpack.c.l.b16 %v57
    %v97 = vunpack.c.l.b16 %v58
    %v98 = vunpack.c.l.b16 %v59
    %v99 = vunpack.c.l.b16 %v60
    %v100 = vunpack.c.l.b16 %v61
    %v101 = vunpack.c.l.b16 %v62
    %v102 = vunpack.c.l.b16 %v63
    %v103 = vunpack.c.l.b16 %v64
    %v104 = vunpack.c.l.b16 %v65
    %v105 = vunpack.c.l.b16 %v66
    %v106 = vunpack.c.l.b16 %v67
    %v107 = vunpack.c.l.b16 %v68
    %v108 = vpack.c.b16 %v93, %v92
    %v109 = vpack.c.b16 %v95, %v94
    %v110 = vpack.c.b16 %v97, %v96
    %v111 = vpack.c.b16 %v99, %v98
    %v112 = vpack.c.b16 %v101, %v100
    %v113 = vpack.c.b16 %v103, %v102
    %v114 = vpack.c.b16 %v105, %v104
    %v115 = vpack.c.b16 %v107, %v106
    %124 = vmatprep.subr.bf16.mxu0 0
    %125 = vmatpush1.bf16.msra.mxu0 %v115
    %126 = vmatprep.subr.bf16.mxu0 0
    %127 = vmatpush1.bf16.msra.mxu0 %v114
    %128 = vmatprep.subr.bf16.mxu0 0
    %129 = vmatpush1.bf16.msra.mxu0 %v113
    %130 = vmatprep.subr.bf16.mxu0 0
    %131 = vmatpush1.bf16.msra.mxu0 %v112
    %132 = vmatprep.subr.bf16.mxu0 0
    %133 = vmatpush1.bf16.msra.mxu0 %v111
    %134 = vmatprep.subr.bf16.mxu0 0
    %135 = vmatpush1.bf16.msra.mxu0 %v110
    %136 = vmatprep.subr.bf16.mxu0 0
    %137 = vmatpush1.bf16.msra.mxu0 %v109
    %138 = vmatprep.subr.bf16.mxu0 0
    %139 = vmatpush1.bf16.msra.mxu0 %v108
    %140 = vmatprep.subr.bf16.mxu0 0
    %141 = vmatpush2.bf16.msra.mxu0 0
    %142 = vmatprep.subr.bf16.mxu0 0
    %143 = vmatpush2.bf16.msra.mxu0 0
    %144 = vmatprep.subr.bf16.mxu0 0
    %145 = vmatpush2.bf16.msra.mxu0 0
    %146 = vmatprep.subr.bf16.mxu0 0
    %147 = vmatpush2.bf16.msra.mxu0 0
    %148 = vmatprep.subr.bf16.mxu0 0
    %149 = vmatpush2.bf16.msra.mxu0 0
    %150 = vmatprep.subr.bf16.mxu0 0
    %151 = vmatpush2.bf16.msra.mxu0 0
    %152 = vmatprep.subr.bf16.mxu0 0
    %153 = vmatpush2.bf16.msra.mxu0 0
    %154 = vmatprep.subr.bf16.mxu0 0
    %155 = vmatpush2.bf16.msra.mxu0 0
    %156 = vmatprep.mubr.bf16.mxu0 0
    %157 = vmatmul.mubr.bf16.gmra.mxu0 %v52
    %v158 = vpop.f32.mrf.mxu0
    %v159 = vadd.f32 %v74, %v158
    %v160 = vpop.f32.mrf.mxu0
    %v161 = vpop.f32.mrf.mxu0
    %v162 = vadd.f32 %v74, %v161
    %v163 = vpop.f32.mrf.mxu0
    %164 = vdwg.mxu0
    %v165 = vmul.f32 %v159, 0.5
    %v166 = vmul.f32 %v162, 0.5
    %v167 = vmul.f32 %v159, 0.70710677
    %v168 = vmul.f32 %v162, 0.70710677
    %v169 = verf.f32.pop %v167
    %v170 = verf.f32.pop %v168
    %v171 = vadd.f32 %v169, 1.0
    %v172 = vadd.f32 %v170, 1.0
    %v173 = vmul.f32 %v165, %v171
    %v174 = vmul.f32 %v166, %v172
    %175 = vadd.xlane.f32.xlu0 %v173
    %v176 = vpop.xlane.xlu0 %175
    %177 = vadd.xlane.f32.xlu0 %v174
    %v178 = vpop.xlane.xlu0 %177
    %v179 = vmul.f32 %v176, 0.0078125
    %v180 = vmul.f32 %v178, 0.0078125
    %v181 = vsub.f32 %v173, %v179
    %v182 = vsub.f32 %v174, %v180
    %v183 = vmul.f32 %v181, %v181
    %v184 = vmul.f32 %v182, %v182
    %185 = vadd.xlane.f32.xlu0 %v183
    %v186 = vpop.xlane.xlu0 %185
    %187 = vadd.xlane.f32.xlu0 %v184
    %v188 = vpop.xlane.xlu0 %187
    %v189 = vmul.f32 %v186, 0.0078125
    %v190 = vmul.f32 %v188, 0.0078125
    %v191 = vadd.f32 %v189, 1e-12
    %v192 = vadd.f32 %v190, 1e-12
    %v193 = vrsqrt.pop %v191
    %v194 = vrsqrt.pop %v192
    %v195 = vmul.f32 %v181, %v193
    %v196 = vmul.f32 %v182, %v194
    %v197 = vld [vmem:[%s3] sm:$0x1]
    %v199 = vlaneseq
    %v200 = vshrl.u32 %v199, 7
    %v201 = vsub.s32 0, %v200
    %v202 = vrot.slane %v197, %v201
    %v204 = vmul.f32 %v195, %v202
    %v205 = vmul.f32 %v196, %v202
    %v206 = vld [vmem:[%s4] sm:$0x1]
    %v208 = vlaneseq
    %v209 = vshrl.u32 %v208, 7
    %v210 = vsub.s32 0, %v209
    %v211 = vrot.slane %v206, %v210
    %v213 = vadd.f32 %v204, %v211
    %v214 = vadd.f32 %v205, %v211
    %v215 = vpack.c.bf16 %v214, %v213
    %v217 = vunpack.c.l.b16 %v215
    %v218 = vunpack.c.h.b16 %v215
    %v219 = vpack.c.b16 %v217, %v217
    %v220 = vpack.c.b16 %v218, %v218
    %223 = vst [vmem:[#allocation7] sm:$0xf] %v219
    %224 = vst [vmem:[#allocation7 + $0x4] sm:$0xf] %v220
    // Predicated region
    $region30: #{tpu_custom_call.1} parent=1 // pred_check
      _
    $region31: #{tpu_custom_call.1} parent=1 // pred_check_branch
      %226 = sbr.rel (0) target = $region33
    $region32: #{tpu_custom_call.1} parent=1 // pred_region
      %s228 = ssub.s32 128, 128
      %229 = vsyncadd [#allocation4], %s228
      %s230 = sshll.u32 [#allocation7], 4
      %s231 = int_to_ptr.vmem [resolvable:$true] %s230
      %236 = dma.vmem_to_hbm [thread:$0]  %s231, 128, %s5, [#allocation4], 64, 64, 4
    $region33: #{tpu_custom_call.1} parent=1 // pred_fallthru
      _
    // Predicated region
    $region34: #{tpu_custom_call.1} parent=1 // pred_check
      _
    $region35: #{tpu_custom_call.1} parent=1 // pred_check_branch
      %238 = sbr.rel (0) target = $region37
    $region36: #{tpu_custom_call.1} parent=1 // pred_region
      %239 = dma.done [#allocation4], 128
    $region37: #{tpu_custom_call.1} parent=1 // pred_fallthru
      _
    %240 = vsyncpa [#allocation3], 1
    %241 = vsyncpa [#allocation6], 1
    %242 = vsyncpa [#allocation4], 1

</llo_original>
